<compile_context>
chip_gen: v6e
topology: v6e:2x2x1
jax: 0.10.0
libtpu: 0.0.40
codegen_flags: <defaults>
</compile_context>

<pallas_src>
import math

import jax
import jax.numpy as jnp
from jax.experimental import pallas as pl
from jax.experimental.pallas import tpu as pltpu

# ---------------- configuration (small, consistent with the module) ----------
NUM_HEADS = 4
HIDDEN = 32
HEAD_DIM = HIDDEN // NUM_HEADS           # 8
BATCH = 2
SEQ = 8
ATTN_DROPOUT = 0.0                        # dropout -> identity in this kernel


@jax.jit
def attention_forward(x, wq, bq, wk, bk, wv, bv, wo, bo):
    """Returns (attention_output, weights) like the PyTorch module."""
    B, S, H = x.shape
    nh = NUM_HEADS
    hd = H // nh
    T = B * S                      # tokens            = 16
    C = nh * T                     # score columns     = 64  (head, batch, key)
    scale = 1.0 / math.sqrt(hd)
    f32 = jnp.float32

    # ---- one-time wrapper-side operand prep (tiny XLA ops, outside kernel) --
    # PyTorch Linear computes y = x @ W.T + b.
    x2d = x.reshape(T, H)                              # (16, 32) tokens on rows
    xt_rep = jnp.tile(x2d.T, (1, nh))                  # (32, 64) x^T tiled per head
    x_rep = jnp.tile(x2d, (nh, 1))                     # (64, 32) x tiled per head

    wq_t = wq.T * scale                                # scale folded into Q
    bq_s = bq * scale                                  # (1, 32)
    wv_t = wv.T                                        # (32, 32)
    wo_t = wo.T                                        # (32, 32)
    # wk kept in (out, in) layout: K^T is produced directly as wk @ x^T.

    # Static structure masks (head block-diagonal + cross-batch kill).
    feat_head = jnp.arange(H) // hd                    # (32,) head of feature
    col_head = jnp.arange(C) // T                      # (64,) head of score col
    col_batch = (jnp.arange(C) % T) // S               # (64,) batch of score col
    row_batch = jnp.arange(T) // S                     # (16,) batch of score row

    kmask = (feat_head[:, None] == col_head[None, :]).astype(f32)    # (32, 64)
    vmask = (col_head[:, None] == feat_head[None, :]).astype(f32)    # (64, 32)
    smask = jnp.where(row_batch[:, None] == col_batch[None, :],
                      0.0, -1e30).astype(f32)                        # (16, 64)
    ones_bd = (col_head[:, None] == col_head[None, :]).astype(f32)   # (64, 64)

    bk_bd = bk.T * kmask                               # (32, 64) masked K bias
    bv_bd = bv * vmask                                 # (64, 32) masked V bias

    def kernel(x_ref, xtr_ref, xr_ref, wq_ref, bq_ref, wk_ref, bkbd_ref,
               kmask_ref, wv_ref, bvbd_ref, vmask_ref, wo_ref, bo_ref,
               smask_ref, onesbd_ref, out_ref, w_ref):
        # Q projection (scale pre-folded):            (16,32) @ (32,32)
        q = jnp.dot(x_ref[...], wq_ref[...],
                    preferred_element_type=f32) + bq_ref[...]

        # Head-block-diagonal K^T slab:               (32,32) @ (32,64)
        kbd = (jnp.dot(wk_ref[...], xtr_ref[...],
                       preferred_element_type=f32) * kmask_ref[...]
               + bkbd_ref[...])

        # Head-block-diagonal V slab:                 (64,32) @ (32,32)
        vbd = (jnp.dot(xr_ref[...], wv_ref[...],
                       preferred_element_type=f32) * vmask_ref[...]
               + bvbd_ref[...])

        # All (head, batch) scores in one MXU pass:   (16,32) @ (32,64)
        scores = jnp.dot(q, kbd, preferred_element_type=f32) + smask_ref[...]

        # Softmax: row-global max (exact, shift-invariant per head block),
        # per-head-block denominator via one block-ones matmul, exact divide.
        m = jnp.max(scores, axis=-1, keepdims=True)
        e = jnp.exp(scores - m)                              # masked cols -> 0
        denom = jnp.dot(e, onesbd_ref[...],
                        preferred_element_type=f32)          # (16,64) broadcast
        probs = e / denom

        # Lane-dense (16, 64) store of all attention weights.
        w_ref[...] = probs.astype(w_ref.dtype)

        # Context lands directly in (B*S, H) head-major layout:
        ctx = jnp.dot(probs, vbd, preferred_element_type=f32)   # (16,64)@(64,32)

        # Output projection: single matmul.
        out_ref[...] = (jnp.dot(ctx, wo_ref[...],
                                preferred_element_type=f32)
                        + bo_ref[...]).astype(out_ref.dtype)

    vmem = pltpu.MemorySpace.VMEM
    out2d, w_slab = pl.pallas_call(
        kernel,
        out_shape=(
            jax.ShapeDtypeStruct((T, H), x.dtype),     # attention output (flat)
            jax.ShapeDtypeStruct((T, C), f32),         # probs slab (16, 64)
        ),
        in_specs=[pl.BlockSpec(memory_space=vmem)] * 15,
        out_specs=(pl.BlockSpec(memory_space=vmem),
                   pl.BlockSpec(memory_space=vmem)),
    )(x2d, xt_rep, x_rep, wq_t, bq_s, wk, bk_bd, kmask,
      wv_t, bv_bd, vmask, wo_t, bo, smask, ones_bd)

    attention_output = out2d.reshape(B, S, H)

    # Unpack (16, 64) slab -> (B, nh, S, S): cols are (head, batch', key);
    # keep only the batch'==batch diagonal (cross-batch entries are exact 0s).
    w5 = w_slab.reshape(B, S, nh, B, S)
    idx = jnp.arange(B)
    weights = w5[idx, :, :, idx, :]                    # (B, S, nh, S)
    weights = weights.transpose(0, 2, 1, 3)            # (B, nh, S, S)
    return attention_output, weights


def _reference(x, wq, bq, wk, bk, wv, bv, wo, bo):
    """Plain-JAX mirror of the PyTorch forward (dropout = identity)."""
    B, S, H = x.shape
    nh = NUM_HEADS
    hd = H // nh

    def lin(a, w, b):
        return jnp.einsum("bsh,oh->bso", a, w) + b[0]

    q = lin(x, wq, bq).reshape(B, S, nh, hd).transpose(0, 2, 1, 3)
    k = lin(x, wk, bk).reshape(B, S, nh, hd).transpose(0, 2, 1, 3)
    v = lin(x, wv, bv).reshape(B, S, nh, hd).transpose(0, 2, 1, 3)

    scores = jnp.einsum("bhqd,bhkd->bhqk", q, k) / math.sqrt(hd)
    probs = jax.nn.softmax(scores, axis=-1)
    ctx = jnp.einsum("bhqk,bhkd->bhqd", probs, v)
    ctx = ctx.transpose(0, 2, 1, 3).reshape(B, S, H)
    out = lin(ctx, wo, bo)
    return out, probs


if __name__ == "__main__":
    key = jax.random.PRNGKey(0)
    keys = jax.random.split(key, 9)

    x = jax.random.normal(keys[0], (BATCH, SEQ, HIDDEN), dtype=jnp.float32)

    def init_linear(kw, kb):
        bound = 1.0 / math.sqrt(HIDDEN)
        w = jax.random.uniform(kw, (HIDDEN, HIDDEN), jnp.float32, -bound, bound)
        b = jax.random.uniform(kb, (1, HIDDEN), jnp.float32, -bound, bound)
        return w, b

    wq, bq = init_linear(keys[1], keys[2])
    wk, bk = init_linear(keys[3], keys[4])
    wv, bv = init_linear(keys[5], keys[6])
    wo, bo = init_linear(keys[7], keys[8])

    out, weights = attention_forward(x, wq, bq, wk, bk, wv, bv, wo, bo)
    out = jax.block_until_ready(out)
    weights = jax.block_until_ready(weights)

    ref_out, ref_w = _reference(x, wq, bq, wk, bk, wv, bv, wo, bo)
    assert out.shape == (BATCH, SEQ, HIDDEN)
    assert weights.shape == (BATCH, NUM_HEADS, SEQ, SEQ)
    # Approx reciprocal was removed (exact divide); remaining tolerance only
    # covers f32 MXU pass / op-ordering differences vs. the XLA reference.
    assert jnp.allclose(out, ref_out, atol=2e-3, rtol=2e-3)
    assert jnp.allclose(weights, ref_w, atol=2e-3, rtol=2e-3)

    print("KERNEL_OK")
</pallas_src>

<mosaic_0001>
module attributes {stable_mosaic.version = 11 : i64} {
  func.func @kernel(%arg0: memref<16x32xf32, #tpu.memory_space<vmem>>, %arg1: memref<32x64xf32, #tpu.memory_space<vmem>>, %arg2: memref<64x32xf32, #tpu.memory_space<vmem>>, %arg3: memref<32x32xf32, #tpu.memory_space<vmem>>, %arg4: memref<1x32xf32, #tpu.memory_space<vmem>>, %arg5: memref<32x32xf32, #tpu.memory_space<vmem>>, %arg6: memref<32x64xf32, #tpu.memory_space<vmem>>, %arg7: memref<32x64xf32, #tpu.memory_space<vmem>>, %arg8: memref<32x32xf32, #tpu.memory_space<vmem>>, %arg9: memref<64x32xf32, #tpu.memory_space<vmem>>, %arg10: memref<64x32xf32, #tpu.memory_space<vmem>>, %arg11: memref<32x32xf32, #tpu.memory_space<vmem>>, %arg12: memref<1x32xf32, #tpu.memory_space<vmem>>, %arg13: memref<16x64xf32, #tpu.memory_space<vmem>>, %arg14: memref<64x64xf32, #tpu.memory_space<vmem>>, %arg15: memref<16x32xf32, #tpu.memory_space<vmem>>, %arg16: memref<16x64xf32, #tpu.memory_space<vmem>>) attributes {dimension_semantics = [], scalar_prefetch = 0 : i64, scratch_operands = 0 : i64, tpu.core_type = #tpu.core_type<tc>} {
    %c0 = arith.constant 0 : index
    %c0_0 = arith.constant 0 : index
    %0 = vector.load %arg0[%c0, %c0_0] : memref<16x32xf32, #tpu.memory_space<vmem>>, vector<16x32xf32>
    %c0_1 = arith.constant 0 : index
    %c0_2 = arith.constant 0 : index
    %1 = vector.load %arg3[%c0_1, %c0_2] : memref<32x32xf32, #tpu.memory_space<vmem>>, vector<32x32xf32>
    %cst = arith.constant dense<0.000000e+00> : vector<16x32xf32>
    %2 = tpu.matmul %0, %1, %cst {dimension_numbers = #tpu.dot_dimension_numbers<[1], [0], [0], [1], [0, 0, 1, 1], [], []>} : vector<16x32xf32>, vector<32x32xf32>, vector<16x32xf32> -> vector<16x32xf32>
    %c0_3 = arith.constant 0 : index
    %c0_4 = arith.constant 0 : index
    %3 = vector.load %arg4[%c0_3, %c0_4] : memref<1x32xf32, #tpu.memory_space<vmem>>, vector<1x32xf32>
    %4 = vector.broadcast %3 : vector<1x32xf32> to vector<16x32xf32>
    %5 = arith.addf %2, %4 : vector<16x32xf32>
    %c0_5 = arith.constant 0 : index
    %c0_6 = arith.constant 0 : index
    %6 = vector.load %arg5[%c0_5, %c0_6] : memref<32x32xf32, #tpu.memory_space<vmem>>, vector<32x32xf32>
    %c0_7 = arith.constant 0 : index
    %c0_8 = arith.constant 0 : index
    %7 = vector.load %arg1[%c0_7, %c0_8] : memref<32x64xf32, #tpu.memory_space<vmem>>, vector<32x64xf32>
    %cst_9 = arith.constant dense<0.000000e+00> : vector<32x64xf32>
    %8 = tpu.matmul %6, %7, %cst_9 {dimension_numbers = #tpu.dot_dimension_numbers<[1], [0], [0], [1], [0, 0, 1, 1], [], []>} : vector<32x32xf32>, vector<32x64xf32>, vector<32x64xf32> -> vector<32x64xf32>
    %c0_10 = arith.constant 0 : index
    %c0_11 = arith.constant 0 : index
    %9 = vector.load %arg7[%c0_10, %c0_11] : memref<32x64xf32, #tpu.memory_space<vmem>>, vector<32x64xf32>
    %10 = arith.mulf %8, %9 : vector<32x64xf32>
    %c0_12 = arith.constant 0 : index
    %c0_13 = arith.constant 0 : index
    %11 = vector.load %arg6[%c0_12, %c0_13] : memref<32x64xf32, #tpu.memory_space<vmem>>, vector<32x64xf32>
    %12 = arith.addf %10, %11 : vector<32x64xf32>
    %c0_14 = arith.constant 0 : index
    %c0_15 = arith.constant 0 : index
    %13 = vector.load %arg2[%c0_14, %c0_15] : memref<64x32xf32, #tpu.memory_space<vmem>>, vector<64x32xf32>
    %c0_16 = arith.constant 0 : index
    %c0_17 = arith.constant 0 : index
    %14 = vector.load %arg8[%c0_16, %c0_17] : memref<32x32xf32, #tpu.memory_space<vmem>>, vector<32x32xf32>
    %cst_18 = arith.constant dense<0.000000e+00> : vector<64x32xf32>
    %15 = tpu.matmul %13, %14, %cst_18 {dimension_numbers = #tpu.dot_dimension_numbers<[1], [0], [0], [1], [0, 0, 1, 1], [], []>} : vector<64x32xf32>, vector<32x32xf32>, vector<64x32xf32> -> vector<64x32xf32>
    %c0_19 = arith.constant 0 : index
    %c0_20 = arith.constant 0 : index
    %16 = vector.load %arg10[%c0_19, %c0_20] : memref<64x32xf32, #tpu.memory_space<vmem>>, vector<64x32xf32>
    %17 = arith.mulf %15, %16 : vector<64x32xf32>
    %c0_21 = arith.constant 0 : index
    %c0_22 = arith.constant 0 : index
    %18 = vector.load %arg9[%c0_21, %c0_22] : memref<64x32xf32, #tpu.memory_space<vmem>>, vector<64x32xf32>
    %19 = arith.addf %17, %18 : vector<64x32xf32>
    %cst_23 = arith.constant dense<0.000000e+00> : vector<16x64xf32>
    %20 = tpu.matmul %5, %12, %cst_23 {dimension_numbers = #tpu.dot_dimension_numbers<[1], [0], [0], [1], [0, 0, 1, 1], [], []>} : vector<16x32xf32>, vector<32x64xf32>, vector<16x64xf32> -> vector<16x64xf32>
    %c0_24 = arith.constant 0 : index
    %c0_25 = arith.constant 0 : index
    %21 = vector.load %arg13[%c0_24, %c0_25] : memref<16x64xf32, #tpu.memory_space<vmem>>, vector<16x64xf32>
    %22 = arith.addf %20, %21 : vector<16x64xf32>
    %cst_26 = arith.constant dense<0xFF800000> : vector<16xf32>
    %23 = vector.multi_reduction <maximumf>, %22, %cst_26 [1] : vector<16x64xf32> to vector<16xf32>
    %24 = vector.shape_cast %23 : vector<16xf32> to vector<16x1xf32>
    %25 = vector.broadcast %24 : vector<16x1xf32> to vector<16x64xf32>
    %26 = arith.subf %22, %25 : vector<16x64xf32>
    %27 = math.exp %26 : vector<16x64xf32>
    %c0_27 = arith.constant 0 : index
    %c0_28 = arith.constant 0 : index
    %28 = vector.load %arg14[%c0_27, %c0_28] : memref<64x64xf32, #tpu.memory_space<vmem>>, vector<64x64xf32>
    %cst_29 = arith.constant dense<0.000000e+00> : vector<16x64xf32>
    %29 = tpu.matmul %27, %28, %cst_29 {dimension_numbers = #tpu.dot_dimension_numbers<[1], [0], [0], [1], [0, 0, 1, 1], [], []>} : vector<16x64xf32>, vector<64x64xf32>, vector<16x64xf32> -> vector<16x64xf32>
    %30 = arith.divf %27, %29 : vector<16x64xf32>
    %c0_30 = arith.constant 0 : index
    %c0_31 = arith.constant 0 : index
    %31 = vector.load %arg16[%c0_30, %c0_31] : memref<16x64xf32, #tpu.memory_space<vmem>>, vector<16x64xf32>
    tpu.vector_store %arg16[%c0_30, %c0_31], %30 {strides = array<i32>} : memref<16x64xf32, #tpu.memory_space<vmem>>, vector<16x64xf32>,
    %cst_32 = arith.constant dense<0.000000e+00> : vector<16x32xf32>
    %32 = tpu.matmul %30, %19, %cst_32 {dimension_numbers = #tpu.dot_dimension_numbers<[1], [0], [0], [1], [0, 0, 1, 1], [], []>} : vector<16x64xf32>, vector<64x32xf32>, vector<16x32xf32> -> vector<16x32xf32>
    %c0_33 = arith.constant 0 : index
    %c0_34 = arith.constant 0 : index
    %33 = vector.load %arg11[%c0_33, %c0_34] : memref<32x32xf32, #tpu.memory_space<vmem>>, vector<32x32xf32>
    %cst_35 = arith.constant dense<0.000000e+00> : vector<16x32xf32>
    %34 = tpu.matmul %32, %33, %cst_35 {dimension_numbers = #tpu.dot_dimension_numbers<[1], [0], [0], [1], [0, 0, 1, 1], [], []>} : vector<16x32xf32>, vector<32x32xf32>, vector<16x32xf32> -> vector<16x32xf32>
    %c0_36 = arith.constant 0 : index
    %c0_37 = arith.constant 0 : index
    %35 = vector.load %arg12[%c0_36, %c0_37] : memref<1x32xf32, #tpu.memory_space<vmem>>, vector<1x32xf32>
    %36 = vector.broadcast %35 : vector<1x32xf32> to vector<16x32xf32>
    %37 = arith.addf %34, %36 : vector<16x32xf32>
    %c0_38 = arith.constant 0 : index
    %c0_39 = arith.constant 0 : index
    %38 = vector.load %arg15[%c0_38, %c0_39] : memref<16x32xf32, #tpu.memory_space<vmem>>, vector<16x32xf32>
    tpu.vector_store %arg15[%c0_38, %c0_39], %37 {strides = array<i32>} : memref<16x32xf32, #tpu.memory_space<vmem>>, vector<16x32xf32>,
    return
  }
}

</mosaic_0001>

<llo_original>
// kernel: attention_forward.1
$region0: #{attention_forward.1}
  #allocation0 [shape = 'u32[]', space=smem, size = 0x4, offset = 0x4, fixed_abs, tag = 'smem constant byte address 0x4 - core index']
  #allocation1 [shape = 'u32[144,128]{1,0:T(1,128)}', space=vmem, size = 0x12000, scoped, tag = 'internal scratch']
  %s0 = inlined_call_operand.vmem [shape: f32[16,32], index: 0, kind: input, shape index: {}]
  %s1 = inlined_call_operand.vmem [shape: f32[32,64], index: 1, kind: input, shape index: {}]
  %s2 = inlined_call_operand.vmem [shape: f32[64,32], index: 2, kind: input, shape index: {}]
  %s3 = inlined_call_operand.vmem [shape: f32[32,32], index: 3, kind: input, shape index: {}]
  %s4 = inlined_call_operand.vmem [shape: f32[1,32], index: 4, kind: input, shape index: {}]
  %s5 = inlined_call_operand.vmem [shape: f32[32,32], index: 5, kind: input, shape index: {}]
  %s6 = inlined_call_operand.vmem [shape: f32[32,64], index: 6, kind: input, shape index: {}]
  %s7 = inlined_call_operand.vmem [shape: f32[32,64], index: 7, kind: input, shape index: {}]
  %s8 = inlined_call_operand.vmem [shape: f32[32,32], index: 8, kind: input, shape index: {}]
  %s9 = inlined_call_operand.vmem [shape: f32[64,32], index: 9, kind: input, shape index: {}]
  %s10 = inlined_call_operand.vmem [shape: f32[64,32], index: 10, kind: input, shape index: {}]
  %s11 = inlined_call_operand.vmem [shape: f32[32,32], index: 11, kind: input, shape index: {}]
  %s12 = inlined_call_operand.vmem [shape: f32[1,32], index: 12, kind: input, shape index: {}]
  %s13 = inlined_call_operand.vmem [shape: f32[16,64], index: 13, kind: input, shape index: {}]
  %s14 = inlined_call_operand.vmem [shape: f32[64,64], index: 14, kind: input, shape index: {}]
  %s15 = inlined_call_operand.hbm [shape: f32[16,32], index: 15, kind: output, shape index: {0}]
  %s16 = inlined_call_operand.vmem [shape: f32[16,64], index: 16, kind: output, shape index: {1}]
  %17 = xla_tuple %s15, %s16
  %s18 = sld [smem:[#allocation0]]
  $region78: #{attention_forward.1} parent=0
    _
  %s20 = ssub.s32 1, %s18
  %s21 = scalar_select 0, %s20, %s18
  $region1: #{attention_forward.1} parent=0
    #allocation2 [shape = 'u8[8192]{0}', space=vmem, size = 0x2000, scoped, tag = 'output window, operand 0, single buffered']
    #allocation3 [shape = 's32[1]{0}', space=sflag, size = 0x4, scoped, tag = 'scoped memory for attention_forward.1']
    %22 = vsyncpa [#allocation3], 0
    // Predicated region
    $region2: #{attention_forward.1} parent=1 // pred_check
      _
    $region3: #{attention_forward.1} parent=1 // pred_check_branch
      %24 = sbr.rel (0) target = $region5
    $region4: #{attention_forward.1} parent=1 // pred_region
      _
    $region5: #{attention_forward.1} parent=1 // pred_fallthru
      _
    // Predicated region
    $region6: #{attention_forward.1} parent=1 // pred_check
      _
    $region7: #{attention_forward.1} parent=1 // pred_check_branch
      %26 = sbr.rel (0) target = $region9
    $region8: #{attention_forward.1} parent=1 // pred_region
      _
    $region9: #{attention_forward.1} parent=1 // pred_fallthru
      _
    // Predicated region
    $region10: #{attention_forward.1} parent=1 // pred_check
      _
    $region11: #{attention_forward.1} parent=1 // pred_check_branch
      %28 = sbr.rel (0) target = $region13
    $region12: #{attention_forward.1} parent=1 // pred_region
      _
    $region13: #{attention_forward.1} parent=1 // pred_fallthru
      _
    // Predicated region
    $region14: #{attention_forward.1} parent=1 // pred_check
      _
    $region15: #{attention_forward.1} parent=1 // pred_check_branch
      %30 = sbr.rel (0) target = $region17
    $region16: #{attention_forward.1} parent=1 // pred_region
      _
    $region17: #{attention_forward.1} parent=1 // pred_fallthru
      _
    // Predicated region
    $region18: #{attention_forward.1} parent=1 // pred_check
      _
    $region19: #{attention_forward.1} parent=1 // pred_check_branch
      %32 = sbr.rel (0) target = $region21
    $region20: #{attention_forward.1} parent=1 // pred_region
      _
    $region21: #{attention_forward.1} parent=1 // pred_fallthru
      _
    // Predicated region
    $region22: #{attention_forward.1} parent=1 // pred_check
      _
    $region23: #{attention_forward.1} parent=1 // pred_check_branch
      %34 = sbr.rel (0) target = $region25
    $region24: #{attention_forward.1} parent=1 // pred_region
      _
    $region25: #{attention_forward.1} parent=1 // pred_fallthru
      _
    // Predicated region
    $region26: #{attention_forward.1} parent=1 // pred_check
      _
    $region27: #{attention_forward.1} parent=1 // pred_check_branch
      %36 = sbr.rel (0) target = $region29
    $region28: #{attention_forward.1} parent=1 // pred_region
      _
    $region29: #{attention_forward.1} parent=1 // pred_fallthru
      _
    // Predicated region
    $region30: #{attention_forward.1} parent=1 // pred_check
      _
    $region31: #{attention_forward.1} parent=1 // pred_check_branch
      %38 = sbr.rel (0) target = $region33
    $region32: #{attention_forward.1} parent=1 // pred_region
      _
    $region33: #{attention_forward.1} parent=1 // pred_fallthru
      _
    // Predicated region
    $region34: #{attention_forward.1} parent=1 // pred_check
      _
    $region35: #{attention_forward.1} parent=1 // pred_check_branch
      %40 = sbr.rel (0) target = $region37
    $region36: #{attention_forward.1} parent=1 // pred_region
      _
    $region37: #{attention_forward.1} parent=1 // pred_fallthru
      _
    // Predicated region
    $region38: #{attention_forward.1} parent=1 // pred_check
      _
    $region39: #{attention_forward.1} parent=1 // pred_check_branch
      %42 = sbr.rel (0) target = $region41
    $region40: #{attention_forward.1} parent=1 // pred_region
      _
    $region41: #{attention_forward.1} parent=1 // pred_fallthru
      _
    // Predicated region
    $region42: #{attention_forward.1} parent=1 // pred_check
      _
    $region43: #{attention_forward.1} parent=1 // pred_check_branch
      %44 = sbr.rel (0) target = $region45
    $region44: #{attention_forward.1} parent=1 // pred_region
      _
    $region45: #{attention_forward.1} parent=1 // pred_fallthru
      _
    // Predicated region
    $region46: #{attention_forward.1} parent=1 // pred_check
      _
    $region47: #{attention_forward.1} parent=1 // pred_check_branch
      %46 = sbr.rel (0) target = $region49
    $region48: #{attention_forward.1} parent=1 // pred_region
      _
    $region49: #{attention_forward.1} parent=1 // pred_fallthru
      _
    // Predicated region
    $region50: #{attention_forward.1} parent=1 // pred_check
      _
    $region51: #{attention_forward.1} parent=1 // pred_check_branch
      %48 = sbr.rel (0) target = $region53
    $region52: #{attention_forward.1} parent=1 // pred_region
      _
    $region53: #{attention_forward.1} parent=1 // pred_fallthru
      _
    // Predicated region
    $region54: #{attention_forward.1} parent=1 // pred_check
      _
    $region55: #{attention_forward.1} parent=1 // pred_check_branch
      %50 = sbr.rel (0) target = $region57
    $region56: #{attention_forward.1} parent=1 // pred_region
      _
    $region57: #{attention_forward.1} parent=1 // pred_fallthru
      _
    // Predicated region
    $region58: #{attention_forward.1} parent=1 // pred_check
      _
    $region59: #{attention_forward.1} parent=1 // pred_check_branch
      %52 = sbr.rel (0) target = $region61
    $region60: #{attention_forward.1} parent=1 // pred_region
      _
    $region61: #{attention_forward.1} parent=1 // pred_fallthru
      _
    %v53 = vld [vmem:[%s0] sm:$0xff]
    %v54 = vld [vmem:[%s0 + $0x8] sm:$0xff]
    %v55 = vld [vmem:[%s3] sm:$0xff]
    %v56 = vld [vmem:[%s3 + $0x8] sm:$0xff]
    %v57 = vld [vmem:[%s3 + $0x10] sm:$0xff]
    %v58 = vld [vmem:[%s3 + $0x18] sm:$0xff]
    %v59 = vld [vmem:[%s4] sm:$0x1]
    %v61 = vlaneseq
    %v62 = vshrl.u32 %v61, 7
    %v63 = vsub.s32 0, %v62
    %v64 = vrot.slane %v59, %v63
    %vm66 = vcmask 261120
    %v68 = vsel %vm66, %v53, 0
    %v71 = vsel %vm66, %v54, 0
    %73 = vmatprep.subr.mxu0 0.0
    %74 = vmatpush1.msra.mxu0 0.0
    %75 = vmatprep.subr.mxu0 0.0
    %76 = vmatpush1.msra.mxu0 0.0
    %77 = vmatprep.subr.mxu0 0.0
    %78 = vmatpush1.msra.mxu0 0.0
    %79 = vmatprep.subr.mxu0 0.0
    %80 = vmatpush1.msra.mxu0 0.0
    %81 = vmatprep.subr.mxu0 0.0
    %82 = vmatpush1.msra.mxu0 0.0
    %83 = vmatprep.subr.mxu0 0.0
    %84 = vmatpush1.msra.mxu0 0.0
    %85 = vmatprep.subr.mxu0 0.0
    %86 = vmatpush1.msra.mxu0 0.0
    %87 = vmatprep.subr.mxu0 0.0
    %88 = vmatpush1.msra.mxu0 0.0
    %89 = vmatprep.subr.mxu0 0.0
    %90 = vmatpush1.msra.mxu0 0.0
    %91 = vmatprep.subr.mxu0 0.0
    %92 = vmatpush1.msra.mxu0 0.0
    %93 = vmatprep.subr.mxu0 0.0
    %94 = vmatpush1.msra.mxu0 0.0
    %95 = vmatprep.subr.mxu0 0.0
    %96 = vmatpush1.msra.mxu0 0.0
    %97 = vmatprep.subr.mxu0 0.0
    %98 = vmatpush1.msra.mxu0 %v58
    %99 = vmatprep.subr.mxu0 0.0
    %100 = vmatpush1.msra.mxu0 %v57
    %101 = vmatprep.subr.mxu0 0.0
    %102 = vmatpush1.msra.mxu0 %v56
    %103 = vmatprep.subr.mxu0 0.0
    %104 = vmatpush1.msra.mxu0 %v55
    %105 = vmatprep.subr.mxu0 0.0
    %106 = vmatpush2.msra.mxu0 0.0
    %107 = vmatprep.subr.mxu0 0.0
    %108 = vmatpush2.msra.mxu0 0.0
    %109 = vmatprep.subr.mxu0 0.0
    %110 = vmatpush2.msra.mxu0 0.0
    %111 = vmatprep.subr.mxu0 0.0
    %112 = vmatpush2.msra.mxu0 0.0
    %113 = vmatprep.subr.mxu0 0.0
    %114 = vmatpush2.msra.mxu0 0.0
    %115 = vmatprep.subr.mxu0 0.0
    %116 = vmatpush2.msra.mxu0 0.0
    %117 = vmatprep.subr.mxu0 0.0
    %118 = vmatpush2.msra.mxu0 0.0
    %119 = vmatprep.subr.mxu0 0.0
    %120 = vmatpush2.msra.mxu0 0.0
    %121 = vmatprep.subr.mxu0 0.0
    %122 = vmatpush2.msra.mxu0 0.0
    %123 = vmatprep.subr.mxu0 0.0
    %124 = vmatpush2.msra.mxu0 0.0
    %125 = vmatprep.subr.mxu0 0.0
    %126 = vmatpush2.msra.mxu0 0.0
    %127 = vmatprep.subr.mxu0 0.0
    %128 = vmatpush2.msra.mxu0 0.0
    %129 = vmatprep.subr.mxu0 0.0
    %130 = vmatpush2.msra.mxu0 0.0
    %131 = vmatprep.subr.mxu0 0.0
    %132 = vmatpush2.msra.mxu0 0.0
    %133 = vmatprep.subr.mxu0 0.0
    %134 = vmatpush2.msra.mxu0 0.0
    %135 = vmatprep.subr.mxu0 0.0
    %136 = vmatpush2.msra.mxu0 0.0
    %137 = vmatprep.mubr.f32.mxu0 0.0
    %138 = vmatmul.mubr.f32.gmra.mxu0 %v68
    %v139 = vpop.f32.mrf.mxu0
    %v140 = vadd.f32 %v64, %v139
    %v141 = vpop.f32.mrf.mxu0
    %142 = vmatprep.mubr.f32.mxu0 0.0
    %143 = vmatmul.mubr.f32.gmra.mxu0 %v71
    %v144 = vpop.f32.mrf.mxu0
    %v145 = vadd.f32 %v64, %v144
    %v146 = vpop.f32.mrf.mxu0
    %147 = vdwg.mxu0
    %v148 = vld [vmem:[%s5] sm:$0xff]
    %v149 = vld [vmem:[%s5 + $0x8] sm:$0xff]
    %v150 = vld [vmem:[%s5 + $0x10] sm:$0xff]
    %v151 = vld [vmem:[%s5 + $0x18] sm:$0xff]
    %v152 = vld [vmem:[%s1] sm:$0xff]
    %v153 = vld [vmem:[%s1 + $0x8] sm:$0xff]
    %v154 = vld [vmem:[%s1 + $0x10] sm:$0xff]
    %v155 = vld [vmem:[%s1 + $0x18] sm:$0xff]
    %v157 = vsel %vm66, %v148, 0
    %v160 = vsel %vm66, %v149, 0
    %v163 = vsel %vm66, %v150, 0
    %v166 = vsel %vm66, %v151, 0
    %168 = vmatprep.subr.mxu0 0.0
    %169 = vmatpush1.msra.mxu0 0.0
    %170 = vmatprep.subr.mxu0 0.0
    %171 = vmatpush1.msra.mxu0 0.0
    %172 = vmatprep.subr.mxu0 0.0
    %173 = vmatpush1.msra.mxu0 0.0
    %174 = vmatprep.subr.mxu0 0.0
    %175 = vmatpush1.msra.mxu0 0.0
    %176 = vmatprep.subr.mxu0 0.0
    %177 = vmatpush1.msra.mxu0 0.0
    %178 = vmatprep.subr.mxu0 0.0
    %179 = vmatpush1.msra.mxu0 0.0
    %180 = vmatprep.subr.mxu0 0.0
    %181 = vmatpush1.msra.mxu0 0.0
    %182 = vmatprep.subr.mxu0 0.0
    %183 = vmatpush1.msra.mxu0 0.0
    %184 = vmatprep.subr.mxu0 0.0
    %185 = vmatpush1.msra.mxu0 0.0
    %186 = vmatprep.subr.mxu0 0.0
    %187 = vmatpush1.msra.mxu0 0.0
    %188 = vmatprep.subr.mxu0 0.0
    %189 = vmatpush1.msra.mxu0 0.0
    %190 = vmatprep.subr.mxu0 0.0
    %191 = vmatpush1.msra.mxu0 0.0
    %192 = vmatprep.subr.mxu0 0.0
    %193 = vmatpush1.msra.mxu0 %v155
    %194 = vmatprep.subr.mxu0 0.0
    %195 = vmatpush1.msra.mxu0 %v154
    %196 = vmatprep.subr.mxu0 0.0
    %197 = vmatpush1.msra.mxu0 %v153
    %198 = vmatprep.subr.mxu0 0.0
    %199 = vmatpush1.msra.mxu0 %v152
    %200 = vmatprep.subr.mxu0 0.0
    %201 = vmatpush2.msra.mxu0 0.0
    %202 = vmatprep.subr.mxu0 0.0
    %203 = vmatpush2.msra.mxu0 0.0
    %204 = vmatprep.subr.mxu0 0.0
    %205 = vmatpush2.msra.mxu0 0.0
    %206 = vmatprep.subr.mxu0 0.0
    %207 = vmatpush2.msra.mxu0 0.0
    %208 = vmatprep.subr.mxu0 0.0
    %209 = vmatpush2.msra.mxu0 0.0
    %210 = vmatprep.subr.mxu0 0.0
    %211 = vmatpush2.msra.mxu0 0.0
    %212 = vmatprep.subr.mxu0 0.0
    %213 = vmatpush2.msra.mxu0 0.0
    %214 = vmatprep.subr.mxu0 0.0
    %215 = vmatpush2.msra.mxu0 0.0
    %216 = vmatprep.subr.mxu0 0.0
    %217 = vmatpush2.msra.mxu0 0.0
    %218 = vmatprep.subr.mxu0 0.0
    %219 = vmatpush2.msra.mxu0 0.0
    %220 = vmatprep.subr.mxu0 0.0
    %221 = vmatpush2.msra.mxu0 0.0
    %222 = vmatprep.subr.mxu0 0.0
    %223 = vmatpush2.msra.mxu0 0.0
    %224 = vmatprep.subr.mxu0 0.0
    %225 = vmatpush2.msra.mxu0 0.0
    %226 = vmatprep.subr.mxu0 0.0
    %227 = vmatpush2.msra.mxu0 0.0
    %228 = vmatprep.subr.mxu0 0.0
    %229 = vmatpush2.msra.mxu0 0.0
    %230 = vmatprep.subr.mxu0 0.0
    %231 = vmatpush2.msra.mxu0 0.0
    %232 = vmatprep.mubr.f32.mxu0 0.0
    %233 = vmatmul.mubr.f32.gmra.mxu0 %v157
    %v234 = vpop.f32.mrf.mxu0
    %v235 = vadd.f32 0.0, %v234
    %v236 = vpop.f32.mrf.mxu0
    %237 = vmatprep.mubr.f32.mxu0 0.0
    %238 = vmatmul.mubr.f32.gmra.mxu0 %v160
    %v239 = vpop.f32.mrf.mxu0
    %v240 = vadd.f32 0.0, %v239
    %v241 = vpop.f32.mrf.mxu0
    %242 = vmatprep.mubr.f32.mxu0 0.0
    %243 = vmatmul.mubr.f32.gmra.mxu0 %v163
    %v244 = vpop.f32.mrf.mxu0
    %v245 = vadd.f32 0.0, %v244
    %v246 = vpop.f32.mrf.mxu0
    %247 = vmatprep.mubr.f32.mxu0 0.0
    %248 = vmatmul.mubr.f32.gmra.mxu0 %v166
    %v249 = vpop.f32.mrf.mxu0
    %v250 = vadd.f32 0.0, %v249
    %v251 = vpop.f32.mrf.mxu0
    %252 = vdwg.mxu0
    %v253 = vld [vmem:[%s7] sm:$0xff]
    %v254 = vld [vmem:[%s7 + $0x8] sm:$0xff]
    %v255 = vld [vmem:[%s7 + $0x10] sm:$0xff]
    %v256 = vld [vmem:[%s7 + $0x18] sm:$0xff]
    %v257 = vmul.f32 %v235, %v253
    %v258 = vmul.f32 %v240, %v254
    %v259 = vmul.f32 %v245, %v255
    %v260 = vmul.f32 %v250, %v256
    %v261 = vld [vmem:[%s6] sm:$0xff]
    %v262 = vld [vmem:[%s6 + $0x8] sm:$0xff]
    %v263 = vld [vmem:[%s6 + $0x10] sm:$0xff]
    %v264 = vld [vmem:[%s6 + $0x18] sm:$0xff]
    %v265 = vadd.f32 %v257, %v261
    %v266 = vadd.f32 %v258, %v262
    %v267 = vadd.f32 %v259, %v263
    %v268 = vadd.f32 %v260, %v264
    %v269 = vld [vmem:[%s2] sm:$0xff]
    %v270 = vld [vmem:[%s2 + $0x8] sm:$0xff]
    %v271 = vld [vmem:[%s2 + $0x10] sm:$0xff]
    %v272 = vld [vmem:[%s2 + $0x18] sm:$0xff]
    %v273 = vld [vmem:[%s2 + $0x20] sm:$0xff]
    %v274 = vld [vmem:[%s2 + $0x28] sm:$0xff]
    %v275 = vld [vmem:[%s2 + $0x30] sm:$0xff]
    %v276 = vld [vmem:[%s2 + $0x38] sm:$0xff]
    %v277 = vld [vmem:[%s8] sm:$0xff]
    %v278 = vld [vmem:[%s8 + $0x8] sm:$0xff]
    %v279 = vld [vmem:[%s8 + $0x10] sm:$0xff]
    %v280 = vld [vmem:[%s8 + $0x18] sm:$0xff]
    %v282 = vsel %vm66, %v269, 0
    %v285 = vsel %vm66, %v270, 0
    %v288 = vsel %vm66, %v271, 0
    %v291 = vsel %vm66, %v272, 0
    %v294 = vsel %vm66, %v273, 0
    %v297 = vsel %vm66, %v274, 0
    %v300 = vsel %vm66, %v275, 0
    %v303 = vsel %vm66, %v276, 0
    %305 = vmatprep.subr.mxu0 0.0
    %306 = vmatpush1.msra.mxu0 0.0
    %307 = vmatprep.subr.mxu0 0.0
    %308 = vmatpush1.msra.mxu0 0.0
    %309 = vmatprep.subr.mxu0 0.0
    %310 = vmatpush1.msra.mxu0 0.0
    %311 = vmatprep.subr.mxu0 0.0
    %312 = vmatpush1.msra.mxu0 0.0
    %313 = vmatprep.subr.mxu0 0.0
    %314 = vmatpush1.msra.mxu0 0.0
    %315 = vmatprep.subr.mxu0 0.0
    %316 = vmatpush1.msra.mxu0 0.0
    %317 = vmatprep.subr.mxu0 0.0
    %318 = vmatpush1.msra.mxu0 0.0
    %319 = vmatprep.subr.mxu0 0.0
    %320 = vmatpush1.msra.mxu0 0.0
    %321 = vmatprep.subr.mxu0 0.0
    %322 = vmatpush1.msra.mxu0 0.0
    %323 = vmatprep.subr.mxu0 0.0
    %324 = vmatpush1.msra.mxu0 0.0
    %325 = vmatprep.subr.mxu0 0.0
    %326 = vmatpush1.msra.mxu0 0.0
    %327 = vmatprep.subr.mxu0 0.0
    %328 = vmatpush1.msra.mxu0 0.0
    %329 = vmatprep.subr.mxu0 0.0
    %330 = vmatpush1.msra.mxu0 %v280
    %331 = vmatprep.subr.mxu0 0.0
    %332 = vmatpush1.msra.mxu0 %v279
    %333 = vmatprep.subr.mxu0 0.0
    %334 = vmatpush1.msra.mxu0 %v278
    %335 = vmatprep.subr.mxu0 0.0
    %336 = vmatpush1.msra.mxu0 %v277
    %337 = vmatprep.subr.mxu0 0.0
    %338 = vmatpush2.msra.mxu0 0.0
    %339 = vmatprep.subr.mxu0 0.0
    %340 = vmatpush2.msra.mxu0 0.0
    %341 = vmatprep.subr.mxu0 0.0
    %342 = vmatpush2.msra.mxu0 0.0
    %343 = vmatprep.subr.mxu0 0.0
    %344 = vmatpush2.msra.mxu0 0.0
    %345 = vmatprep.subr.mxu0 0.0
    %346 = vmatpush2.msra.mxu0 0.0
    %347 = vmatprep.subr.mxu0 0.0
    %348 = vmatpush2.msra.mxu0 0.0
    %349 = vmatprep.subr.mxu0 0.0
    %350 = vmatpush2.msra.mxu0 0.0
    %351 = vmatprep.subr.mxu0 0.0
    %352 = vmatpush2.msra.mxu0 0.0
    %353 = vmatprep.subr.mxu0 0.0
    %354 = vmatpush2.msra.mxu0 0.0
    %355 = vmatprep.subr.mxu0 0.0
    %356 = vmatpush2.msra.mxu0 0.0
    %357 = vmatprep.subr.mxu0 0.0
    %358 = vmatpush2.msra.mxu0 0.0
    %359 = vmatprep.subr.mxu0 0.0
    %360 = vmatpush2.msra.mxu0 0.0
    %361 = vmatprep.subr.mxu0 0.0
    %362 = vmatpush2.msra.mxu0 0.0
    %363 = vmatprep.subr.mxu0 0.0
    %364 = vmatpush2.msra.mxu0 0.0
    %365 = vmatprep.subr.mxu0 0.0
    %366 = vmatpush2.msra.mxu0 0.0
    %367 = vmatprep.subr.mxu0 0.0
    %368 = vmatpush2.msra.mxu0 0.0
    %369 = vmatprep.mubr.f32.mxu0 0.0
    %370 = vmatmul.mubr.f32.gmra.mxu0 %v282
    %v371 = vpop.f32.mrf.mxu0
    %v372 = vadd.f32 0.0, %v371
    %v373 = vpop.f32.mrf.mxu0
    %374 = vmatprep.mubr.f32.mxu0 0.0
    %375 = vmatmul.mubr.f32.gmra.mxu0 %v285
    %v376 = vpop.f32.mrf.mxu0
    %v377 = vadd.f32 0.0, %v376
    %v378 = vpop.f32.mrf.mxu0
    %379 = vmatprep.mubr.f32.mxu0 0.0
    %380 = vmatmul.mubr.f32.gmra.mxu0 %v288
    %v381 = vpop.f32.mrf.mxu0
    %v382 = vadd.f32 0.0, %v381
    %v383 = vpop.f32.mrf.mxu0
    %384 = vmatprep.mubr.f32.mxu0 0.0
    %385 = vmatmul.mubr.f32.gmra.mxu0 %v291
    %v386 = vpop.f32.mrf.mxu0
    %v387 = vadd.f32 0.0, %v386
    %v388 = vpop.f32.mrf.mxu0
    %389 = vmatprep.mubr.f32.mxu0 0.0
    %390 = vmatmul.mubr.f32.gmra.mxu0 %v294
    %v391 = vpop.f32.mrf.mxu0
    %v392 = vadd.f32 0.0, %v391
    %v393 = vpop.f32.mrf.mxu0
    %394 = vmatprep.mubr.f32.mxu0 0.0
    %395 = vmatmul.mubr.f32.gmra.mxu0 %v297
    %v396 = vpop.f32.mrf.mxu0
    %v397 = vadd.f32 0.0, %v396
    %v398 = vpop.f32.mrf.mxu0
    %399 = vmatprep.mubr.f32.mxu0 0.0
    %400 = vmatmul.mubr.f32.gmra.mxu0 %v300
    %v401 = vpop.f32.mrf.mxu0
    %v402 = vadd.f32 0.0, %v401
    %v403 = vpop.f32.mrf.mxu0
    %404 = vmatprep.mubr.f32.mxu0 0.0
    %405 = vmatmul.mubr.f32.gmra.mxu0 %v303
    %v406 = vpop.f32.mrf.mxu0
    %v407 = vadd.f32 0.0, %v406
    %v408 = vpop.f32.mrf.mxu0
    %409 = vdwg.mxu0
    %v410 = vld [vmem:[%s10] sm:$0xff]
    %v411 = vld [vmem:[%s10 + $0x8] sm:$0xff]
    %v412 = vld [vmem:[%s10 + $0x10] sm:$0xff]
    %v413 = vld [vmem:[%s10 + $0x18] sm:$0xff]
    %v414 = vld [vmem:[%s10 + $0x20] sm:$0xff]
    %v415 = vld [vmem:[%s10 + $0x28] sm:$0xff]
    %v416 = vld [vmem:[%s10 + $0x30] sm:$0xff]
    %v417 = vld [vmem:[%s10 + $0x38] sm:$0xff]
    %v418 = vmul.f32 %v372, %v410
    %v419 = vmul.f32 %v377, %v411
    %v420 = vmul.f32 %v382, %v412
    %v421 = vmul.f32 %v387, %v413
    %v422 = vmul.f32 %v392, %v414
    %v423 = vmul.f32 %v397, %v415
    %v424 = vmul.f32 %v402, %v416
    %v425 = vmul.f32 %v407, %v417
    %v426 = vld [vmem:[%s9] sm:$0xff]
    %v427 = vld [vmem:[%s9 + $0x8] sm:$0xff]
    %v428 = vld [vmem:[%s9 + $0x10] sm:$0xff]
    %v429 = vld [vmem:[%s9 + $0x18] sm:$0xff]
    %v430 = vld [vmem:[%s9 + $0x20] sm:$0xff]
    %v431 = vld [vmem:[%s9 + $0x28] sm:$0xff]
    %v432 = vld [vmem:[%s9 + $0x30] sm:$0xff]
    %v433 = vld [vmem:[%s9 + $0x38] sm:$0xff]
    %v434 = vadd.f32 %v418, %v426
    %v435 = vadd.f32 %v419, %v427
    %v436 = vadd.f32 %v420, %v428
    %v437 = vadd.f32 %v421, %v429
    %v438 = vadd.f32 %v422, %v430
    %v439 = vadd.f32 %v423, %v431
    %v440 = vadd.f32 %v424, %v432
    %v441 = vadd.f32 %v425, %v433
    %v442 = vld [vmem:[%s13] sm:$0xff]
    %v443 = vld [vmem:[%s13 + $0x8] sm:$0xff]
    %v445 = vsel %vm66, %v140, 0
    %v448 = vsel %vm66, %v145, 0
    %450 = vmatprep.subr.mxu0 0.0
    %451 = vmatpush1.msra.mxu0 0.0
    %452 = vmatprep.subr.mxu0 0.0
    %453 = vmatpush1.msra.mxu0 0.0
    %454 = vmatprep.subr.mxu0 0.0
    %455 = vmatpush1.msra.mxu0 0.0
    %456 = vmatprep.subr.mxu0 0.0
    %457 = vmatpush1.msra.mxu0 0.0
    %458 = vmatprep.subr.mxu0 0.0
    %459 = vmatpush1.msra.mxu0 0.0
    %460 = vmatprep.subr.mxu0 0.0
    %461 = vmatpush1.msra.mxu0 0.0
    %462 = vmatprep.subr.mxu0 0.0
    %463 = vmatpush1.msra.mxu0 0.0
    %464 = vmatprep.subr.mxu0 0.0
    %465 = vmatpush1.msra.mxu0 0.0
    %466 = vmatprep.subr.mxu0 0.0
    %467 = vmatpush1.msra.mxu0 0.0
    %468 = vmatprep.subr.mxu0 0.0
    %469 = vmatpush1.msra.mxu0 0.0
    %470 = vmatprep.subr.mxu0 0.0
    %471 = vmatpush1.msra.mxu0 0.0
    %472 = vmatprep.subr.mxu0 0.0
    %473 = vmatpush1.msra.mxu0 0.0
    %474 = vmatprep.subr.mxu0 0.0
    %475 = vmatpush1.msra.mxu0 %v268
    %476 = vmatprep.subr.mxu0 0.0
    %477 = vmatpush1.msra.mxu0 %v267
    %478 = vmatprep.subr.mxu0 0.0
    %479 = vmatpush1.msra.mxu0 %v266
    %480 = vmatprep.subr.mxu0 0.0
    %481 = vmatpush1.msra.mxu0 %v265
    %482 = vmatprep.subr.mxu0 0.0
    %483 = vmatpush2.msra.mxu0 0.0
    %484 = vmatprep.subr.mxu0 0.0
    %485 = vmatpush2.msra.mxu0 0.0
    %486 = vmatprep.subr.mxu0 0.0
    %487 = vmatpush2.msra.mxu0 0.0
    %488 = vmatprep.subr.mxu0 0.0
    %489 = vmatpush2.msra.mxu0 0.0
    %490 = vmatprep.subr.mxu0 0.0
    %491 = vmatpush2.msra.mxu0 0.0
    %492 = vmatprep.subr.mxu0 0.0
    %493 = vmatpush2.msra.mxu0 0.0
    %494 = vmatprep.subr.mxu0 0.0
    %495 = vmatpush2.msra.mxu0 0.0
    %496 = vmatprep.subr.mxu0 0.0
    %497 = vmatpush2.msra.mxu0 0.0
    %498 = vmatprep.subr.mxu0 0.0
    %499 = vmatpush2.msra.mxu0 0.0
    %500 = vmatprep.subr.mxu0 0.0
    %501 = vmatpush2.msra.mxu0 0.0
    %502 = vmatprep.subr.mxu0 0.0
    %503 = vmatpush2.msra.mxu0 0.0
    %504 = vmatprep.subr.mxu0 0.0
    %505 = vmatpush2.msra.mxu0 0.0
    %506 = vmatprep.subr.mxu0 0.0
    %507 = vmatpush2.msra.mxu0 0.0
    %508 = vmatprep.subr.mxu0 0.0
    %509 = vmatpush2.msra.mxu0 0.0
    %510 = vmatprep.subr.mxu0 0.0
    %511 = vmatpush2.msra.mxu0 0.0
    %512 = vmatprep.subr.mxu0 0.0
    %513 = vmatpush2.msra.mxu0 0.0
    %514 = vmatprep.mubr.f32.mxu0 0.0
    %515 = vmatmul.mubr.f32.gmra.mxu0 %v445
    %v516 = vpop.f32.mrf.mxu0
    %v517 = vadd.f32 %v442, %v516
    %v518 = vpop.f32.mrf.mxu0
    %519 = vmatprep.mubr.f32.mxu0 0.0
    %520 = vmatmul.mubr.f32.gmra.mxu0 %v448
    %v521 = vpop.f32.mrf.mxu0
    %v522 = vadd.f32 %v443, %v521
    %v523 = vpop.f32.mrf.mxu0
    %524 = vdwg.mxu0
    %vm525 = vcmask 523264
    %v526 = vsel %vm525, %v517, -inf
    %527 = vmax.xlane.f32.xlu0 %v526
    %v528 = vpop.xlane.xlu0 %527
    %v529 = vsel %vm525, %v522, -inf
    %530 = vmax.xlane.f32.xlu0 %v529
    %v531 = vpop.xlane.xlu0 %530
    %v532 = vsub.f32 %v517, %v528
    %v533 = vsub.f32 %v522, %v531
    %v534 = vmul.f32 %v532, 1.442695
    %v535 = vpow.pop %v534
    %v536 = vmul.f32 %v533, 1.442695
    %v537 = vpow.pop %v536
    %v538 = vld [vmem:[%s14] sm:$0xff]
    %v539 = vld [vmem:[%s14 + $0x8] sm:$0xff]
    %v540 = vld [vmem:[%s14 + $0x10] sm:$0xff]
    %v541 = vld [vmem:[%s14 + $0x18] sm:$0xff]
    %v542 = vld [vmem:[%s14 + $0x20] sm:$0xff]
    %v543 = vld [vmem:[%s14 + $0x28] sm:$0xff]
    %v544 = vld [vmem:[%s14 + $0x30] sm:$0xff]
    %v545 = vld [vmem:[%s14 + $0x38] sm:$0xff]
    %v547 = vsel %vm525, %v535, 0
    %v550 = vsel %vm525, %v537, 0
    %552 = vmatprep.subr.mxu0 0.0
    %553 = vmatpush1.msra.mxu0 0.0
    %554 = vmatprep.subr.mxu0 0.0
    %555 = vmatpush1.msra.mxu0 0.0
    %556 = vmatprep.subr.mxu0 0.0
    %557 = vmatpush1.msra.mxu0 0.0
    %558 = vmatprep.subr.mxu0 0.0
    %559 = vmatpush1.msra.mxu0 0.0
    %560 = vmatprep.subr.mxu0 0.0
    %561 = vmatpush1.msra.mxu0 0.0
    %562 = vmatprep.subr.mxu0 0.0
    %563 = vmatpush1.msra.mxu0 0.0
    %564 = vmatprep.subr.mxu0 0.0
    %565 = vmatpush1.msra.mxu0 0.0
    %566 = vmatprep.subr.mxu0 0.0
    %567 = vmatpush1.msra.mxu0 0.0
    %568 = vmatprep.subr.mxu0 0.0
    %569 = vmatpush1.msra.mxu0 %v545
    %570 = vmatprep.subr.mxu0 0.0
    %571 = vmatpush1.msra.mxu0 %v544
    %572 = vmatprep.subr.mxu0 0.0
    %573 = vmatpush1.msra.mxu0 %v543
    %574 = vmatprep.subr.mxu0 0.0
    %575 = vmatpush1.msra.mxu0 %v542
    %576 = vmatprep.subr.mxu0 0.0
    %577 = vmatpush1.msra.mxu0 %v541
    %578 = vmatprep.subr.mxu0 0.0
    %579 = vmatpush1.msra.mxu0 %v540
    %580 = vmatprep.subr.mxu0 0.0
    %581 = vmatpush1.msra.mxu0 %v539
    %582 = vmatprep.subr.mxu0 0.0
    %583 = vmatpush1.msra.mxu0 %v538
    %584 = vmatprep.subr.mxu0 0.0
    %585 = vmatpush2.msra.mxu0 0.0
    %586 = vmatprep.subr.mxu0 0.0
    %587 = vmatpush2.msra.mxu0 0.0
    %588 = vmatprep.subr.mxu0 0.0
    %589 = vmatpush2.msra.mxu0 0.0
    %590 = vmatprep.subr.mxu0 0.0
    %591 = vmatpush2.msra.mxu0 0.0
    %592 = vmatprep.subr.mxu0 0.0
    %593 = vmatpush2.msra.mxu0 0.0
    %594 = vmatprep.subr.mxu0 0.0
    %595 = vmatpush2.msra.mxu0 0.0
    %596 = vmatprep.subr.mxu0 0.0
    %597 = vmatpush2.msra.mxu0 0.0
    %598 = vmatprep.subr.mxu0 0.0
    %599 = vmatpush2.msra.mxu0 0.0
    %600 = vmatprep.subr.mxu0 0.0
    %601 = vmatpush2.msra.mxu0 0.0
    %602 = vmatprep.subr.mxu0 0.0
    %603 = vmatpush2.msra.mxu0 0.0
    %604 = vmatprep.subr.mxu0 0.0
    %605 = vmatpush2.msra.mxu0 0.0
    %606 = vmatprep.subr.mxu0 0.0
    %607 = vmatpush2.msra.mxu0 0.0
    %608 = vmatprep.subr.mxu0 0.0
    %609 = vmatpush2.msra.mxu0 0.0
    %610 = vmatprep.subr.mxu0 0.0
    %611 = vmatpush2.msra.mxu0 0.0
    %612 = vmatprep.subr.mxu0 0.0
    %613 = vmatpush2.msra.mxu0 0.0
    %614 = vmatprep.subr.mxu0 0.0
    %615 = vmatpush2.msra.mxu0 0.0
    %616 = vmatprep.mubr.f32.mxu0 0.0
    %617 = vmatmul.mubr.f32.gmra.mxu0 %v547
    %v618 = vpop.f32.mrf.mxu0
    %v619 = vadd.f32 0.0, %v618
    %v620 = vpop.f32.mrf.mxu0
    %621 = vmatprep.mubr.f32.mxu0 0.0
    %622 = vmatmul.mubr.f32.gmra.mxu0 %v550
    %v623 = vpop.f32.mrf.mxu0
    %v624 = vadd.f32 0.0, %v623
    %v625 = vpop.f32.mrf.mxu0
    %626 = vdwg.mxu0
    %v627 = vrcp.pop %v619
    %v628 = vmul.f32 %v535, %v627
    %v629 = vrcp.pop %v624
    %v630 = vmul.f32 %v537, %v629
    %631 = vst.msk [vmem:[%s16] sm:$0xff] %vm525, %v628
    %632 = vst.msk [vmem:[%s16 + $0x8] sm:$0xff] %vm525, %v630
    %v634 = vsel %vm525, %v628, 0
    %v637 = vsel %vm525, %v630, 0
    %639 = vmatprep.subr.mxu0 0.0
    %640 = vmatpush1.msra.mxu0 0.0
    %641 = vmatprep.subr.mxu0 0.0
    %642 = vmatpush1.msra.mxu0 0.0
    %643 = vmatprep.subr.mxu0 0.0
    %644 = vmatpush1.msra.mxu0 0.0
    %645 = vmatprep.subr.mxu0 0.0
    %646 = vmatpush1.msra.mxu0 0.0
    %647 = vmatprep.subr.mxu0 0.0
    %648 = vmatpush1.msra.mxu0 0.0
    %649 = vmatprep.subr.mxu0 0.0
    %650 = vmatpush1.msra.mxu0 0.0
    %651 = vmatprep.subr.mxu0 0.0
    %652 = vmatpush1.msra.mxu0 0.0
    %653 = vmatprep.subr.mxu0 0.0
    %654 = vmatpush1.msra.mxu0 0.0
    %655 = vmatprep.subr.mxu0 0.0
    %656 = vmatpush1.msra.mxu0 %v441
    %657 = vmatprep.subr.mxu0 0.0
    %658 = vmatpush1.msra.mxu0 %v440
    %659 = vmatprep.subr.mxu0 0.0
    %660 = vmatpush1.msra.mxu0 %v439
    %661 = vmatprep.subr.mxu0 0.0
    %662 = vmatpush1.msra.mxu0 %v438
    %663 = vmatprep.subr.mxu0 0.0
    %664 = vmatpush1.msra.mxu0 %v437
    %665 = vmatprep.subr.mxu0 0.0
    %666 = vmatpush1.msra.mxu0 %v436
    %667 = vmatprep.subr.mxu0 0.0
    %668 = vmatpush1.msra.mxu0 %v435
    %669 = vmatprep.subr.mxu0 0.0
    %670 = vmatpush1.msra.mxu0 %v434
    %671 = vmatprep.subr.mxu0 0.0
    %672 = vmatpush2.msra.mxu0 0.0
    %673 = vmatprep.subr.mxu0 0.0
    %674 = vmatpush2.msra.mxu0 0.0
    %675 = vmatprep.subr.mxu0 0.0
    %676 = vmatpush2.msra.mxu0 0.0
    %677 = vmatprep.subr.mxu0 0.0
    %678 = vmatpush2.msra.mxu0 0.0
    %679 = vmatprep.subr.mxu0 0.0
    %680 = vmatpush2.msra.mxu0 0.0
    %681 = vmatprep.subr.mxu0 0.0
    %682 = vmatpush2.msra.mxu0 0.0
    %683 = vmatprep.subr.mxu0 0.0
    %684 = vmatpush2.msra.mxu0 0.0
    %685 = vmatprep.subr.mxu0 0.0
    %686 = vmatpush2.msra.mxu0 0.0
    %687 = vmatprep.subr.mxu0 0.0
    %688 = vmatpush2.msra.mxu0 0.0
    %689 = vmatprep.subr.mxu0 0.0
    %690 = vmatpush2.msra.mxu0 0.0
    %691 = vmatprep.subr.mxu0 0.0
    %692 = vmatpush2.msra.mxu0 0.0
    %693 = vmatprep.subr.mxu0 0.0
    %694 = vmatpush2.msra.mxu0 0.0
    %695 = vmatprep.subr.mxu0 0.0
    %696 = vmatpush2.msra.mxu0 0.0
    %697 = vmatprep.subr.mxu0 0.0
    %698 = vmatpush2.msra.mxu0 0.0
    %699 = vmatprep.subr.mxu0 0.0
    %700 = vmatpush2.msra.mxu0 0.0
    %701 = vmatprep.subr.mxu0 0.0
    %702 = vmatpush2.msra.mxu0 0.0
    %703 = vmatprep.mubr.f32.mxu0 0.0
    %704 = vmatmul.mubr.f32.gmra.mxu0 %v634
    %v705 = vpop.f32.mrf.mxu0
    %v706 = vadd.f32 0.0, %v705
    %v707 = vpop.f32.mrf.mxu0
    %708 = vmatprep.mubr.f32.mxu0 0.0
    %709 = vmatmul.mubr.f32.gmra.mxu0 %v637
    %v710 = vpop.f32.mrf.mxu0
    %v711 = vadd.f32 0.0, %v710
    %v712 = vpop.f32.mrf.mxu0
    %713 = vdwg.mxu0
    %v714 = vld [vmem:[%s11] sm:$0xff]
    %v715 = vld [vmem:[%s11 + $0x8] sm:$0xff]
    %v716 = vld [vmem:[%s11 + $0x10] sm:$0xff]
    %v717 = vld [vmem:[%s11 + $0x18] sm:$0xff]
    %v718 = vld [vmem:[%s12] sm:$0x1]
    %v720 = vlaneseq
    %v721 = vshrl.u32 %v720, 7
    %v722 = vsub.s32 0, %v721
    %v723 = vrot.slane %v718, %v722
    %v726 = vsel %vm66, %v706, 0
    %v729 = vsel %vm66, %v711, 0
    %731 = vmatprep.subr.mxu0 0.0
    %732 = vmatpush1.msra.mxu0 0.0
    %733 = vmatprep.subr.mxu0 0.0
    %734 = vmatpush1.msra.mxu0 0.0
    %735 = vmatprep.subr.mxu0 0.0
    %736 = vmatpush1.msra.mxu0 0.0
    %737 = vmatprep.subr.mxu0 0.0
    %738 = vmatpush1.msra.mxu0 0.0
    %739 = vmatprep.subr.mxu0 0.0
    %740 = vmatpush1.msra.mxu0 0.0
    %741 = vmatprep.subr.mxu0 0.0
    %742 = vmatpush1.msra.mxu0 0.0
    %743 = vmatprep.subr.mxu0 0.0
    %744 = vmatpush1.msra.mxu0 0.0
    %745 = vmatprep.subr.mxu0 0.0
    %746 = vmatpush1.msra.mxu0 0.0
    %747 = vmatprep.subr.mxu0 0.0
    %748 = vmatpush1.msra.mxu0 0.0
    %749 = vmatprep.subr.mxu0 0.0
    %750 = vmatpush1.msra.mxu0 0.0
    %751 = vmatprep.subr.mxu0 0.0
    %752 = vmatpush1.msra.mxu0 0.0
    %753 = vmatprep.subr.mxu0 0.0
    %754 = vmatpush1.msra.mxu0 0.0
    %755 = vmatprep.subr.mxu0 0.0
    %756 = vmatpush1.msra.mxu0 %v717
    %757 = vmatprep.subr.mxu0 0.0
    %758 = vmatpush1.msra.mxu0 %v716
    %759 = vmatprep.subr.mxu0 0.0
    %760 = vmatpush1.msra.mxu0 %v715
    %761 = vmatprep.subr.mxu0 0.0
    %762 = vmatpush1.msra.mxu0 %v714
    %763 = vmatprep.subr.mxu0 0.0
    %764 = vmatpush2.msra.mxu0 0.0
    %765 = vmatprep.subr.mxu0 0.0
    %766 = vmatpush2.msra.mxu0 0.0
    %767 = vmatprep.subr.mxu0 0.0
    %768 = vmatpush2.msra.mxu0 0.0
    %769 = vmatprep.subr.mxu0 0.0
    %770 = vmatpush2.msra.mxu0 0.0
    %771 = vmatprep.subr.mxu0 0.0
    %772 = vmatpush2.msra.mxu0 0.0
    %773 = vmatprep.subr.mxu0 0.0
    %774 = vmatpush2.msra.mxu0 0.0
    %775 = vmatprep.subr.mxu0 0.0
    %776 = vmatpush2.msra.mxu0 0.0
    %777 = vmatprep.subr.mxu0 0.0
    %778 = vmatpush2.msra.mxu0 0.0
    %779 = vmatprep.subr.mxu0 0.0
    %780 = vmatpush2.msra.mxu0 0.0
    %781 = vmatprep.subr.mxu0 0.0
    %782 = vmatpush2.msra.mxu0 0.0
    %783 = vmatprep.subr.mxu0 0.0
    %784 = vmatpush2.msra.mxu0 0.0
    %785 = vmatprep.subr.mxu0 0.0
    %786 = vmatpush2.msra.mxu0 0.0
    %787 = vmatprep.subr.mxu0 0.0
    %788 = vmatpush2.msra.mxu0 0.0
    %789 = vmatprep.subr.mxu0 0.0
    %790 = vmatpush2.msra.mxu0 0.0
    %791 = vmatprep.subr.mxu0 0.0
    %792 = vmatpush2.msra.mxu0 0.0
    %793 = vmatprep.subr.mxu0 0.0
    %794 = vmatpush2.msra.mxu0 0.0
    %795 = vmatprep.mubr.f32.mxu0 0.0
    %796 = vmatmul.mubr.f32.gmra.mxu0 %v726
    %v797 = vpop.f32.mrf.mxu0
    %v798 = vadd.f32 %v723, %v797
    %v799 = vpop.f32.mrf.mxu0
    %800 = vmatprep.mubr.f32.mxu0 0.0
    %801 = vmatmul.mubr.f32.gmra.mxu0 %v729
    %v802 = vpop.f32.mrf.mxu0
    %v803 = vadd.f32 %v723, %v802
    %v804 = vpop.f32.mrf.mxu0
    %805 = vdwg.mxu0
    %806 = vst.msk [vmem:[#allocation2] sm:$0xff] %vm66, %v798
    %807 = vst.msk [vmem:[#allocation2 + $0x8] sm:$0xff] %vm66, %v803
    // Predicated region
    $region62: #{attention_forward.1} parent=1 // pred_check
      _
    $region63: #{attention_forward.1} parent=1 // pred_check_branch
      %809 = sbr.rel (0) target = $region65
    $region64: #{attention_forward.1} parent=1 // pred_region
      %s811 = ssub.s32 256, 256
      %812 = vsyncadd [#allocation3], %s811
      %s813 = sshll.u32 [#allocation2], 4
      %s814 = int_to_ptr.vmem [resolvable:$true] %s813
      %819 = dma.vmem_to_hbm [thread:$0]  %s814, 256, %s15, [#allocation3], 128, 128, 8
    $region65: #{attention_forward.1} parent=1 // pred_fallthru
      _
    // Predicated region
    $region66: #{attention_forward.1} parent=1 // pred_check
      _
    $region67: #{attention_forward.1} parent=1 // pred_check_branch
      %821 = sbr.rel (0) target = $region69
    $region68: #{attention_forward.1} parent=1 // pred_region
      _
    $region69: #{attention_forward.1} parent=1 // pred_fallthru
      _
    // Predicated region
    $region70: #{attention_forward.1} parent=1 // pred_check
      _
    $region71: #{attention_forward.1} parent=1 // pred_check_branch
      %823 = sbr.rel (0) target = $region73
    $region72: #{attention_forward.1} parent=1 // pred_region
      %824 = dma.done [#allocation3], 256
    $region73: #{attention_forward.1} parent=1 // pred_fallthru
      _
    // Predicated region
    $region74: #{attention_forward.1} parent=1 // pred_check
      _
    $region75: #{attention_forward.1} parent=1 // pred_check_branch
      %826 = sbr.rel (0) target = $region77
    $region76: #{attention_forward.1} parent=1 // pred_region
      _
    $region77: #{attention_forward.1} parent=1 // pred_fallthru
      _
    %827 = vsyncpa [#allocation3], 1

</llo_original>
